<compile_context>
chip_gen: v6e
topology: v6e:2x2x1
jax: 0.10.0
libtpu: 0.0.40
codegen_flags: <defaults>
</compile_context>

<pallas_src>
import functools
import math

import jax
import jax.numpy as jnp
from jax.experimental import pallas as pl
from jax.experimental.pallas import tpu as pltpu

_LANES = 128
# ~1 MiB per block buffer.
_TARGET_BLOCK_BYTES = 1 << 20


def _scale_kernel(scale_ref, x_ref, o_ref):
    # Memory-bound elementwise scale: o = x * scale. scale lives in SMEM as
    # float32; multiply in f32 and cast back to the storage dtype.
    o_ref[...] = (x_ref[...].astype(jnp.float32) * scale_ref[0]).astype(o_ref.dtype)


def _round_up(x, m):
    return ((x + m - 1) // m) * m


def _sublane_packing(dtype):
    # Sub-32-bit dtypes pack along sublanes: 8 rows (f32), 16 (bf16), 32 (i8/fp8).
    return max(8, 32 // jnp.dtype(dtype).itemsize)


def _pallas_scale(x, scale):
    """Elementwise `x * scale` (scale is a static Python float) via Pallas."""
    orig_shape = x.shape
    dtype = x.dtype
    itemsize = jnp.dtype(dtype).itemsize
    n = math.prod(orig_shape) if orig_shape else 1

    packing = _sublane_packing(dtype)
    chunk = packing * _LANES

    flat = jnp.ravel(x)
    n_pad = _round_up(n, chunk)
    if n_pad != n:
        # TODO(synk): mask the ragged tail inside the kernel instead of padding.
        flat = jnp.pad(flat, (0, n_pad - n))
    rows = n_pad // _LANES
    x2d = flat.reshape(rows, _LANES)

    # Large lane-dense blocks (amortize ~0.35us per-grid-step overhead), but
    # keep at least 2 grid steps for mid/large tensors so both v7x TCs work.
    target_rows = max(packing, _TARGET_BLOCK_BYTES // (_LANES * itemsize))
    block_rows = min(rows, target_rows, _round_up(pl.cdiv(rows, 2), packing))
    grid = (pl.cdiv(rows, block_rows),)

    scale_arr = jnp.asarray(scale, dtype=jnp.float32).reshape(1)

    out2d = pl.pallas_call(
        _scale_kernel,
        out_shape=jax.ShapeDtypeStruct((rows, _LANES), dtype),
        grid_spec=pltpu.PrefetchScalarGridSpec(
            num_scalar_prefetch=0,
            grid=grid,
            in_specs=[
                pl.BlockSpec(memory_space=pltpu.MemorySpace.SMEM),  # f32 scale
                pl.BlockSpec((block_rows, _LANES), lambda i: (i, 0)),
            ],
            out_specs=pl.BlockSpec((block_rows, _LANES), lambda i: (i, 0)),
        ),
        compiler_params=pltpu.CompilerParams(
            dimension_semantics=("parallel",),
        ),
        input_output_aliases={1: 0},  # write the scaled grad in place
        cost_estimate=pl.CostEstimate(
            flops=n_pad,
            transcendentals=0,
            bytes_accessed=2 * n_pad * itemsize,
        ),
    )(scale_arr, x2d)

    out_flat = out2d.reshape(-1)
    if n_pad != n:
        out_flat = out_flat[:n]
    return out_flat.reshape(orig_shape)


# ---- gradient-reverse: forward = identity, backward = -coeff * grad --------
# coeff is a *static* Python number (matches PyTorch's ctx.coeff), so it is a
# nondiff argument and receives no cotangent.

@functools.partial(jax.custom_vjp, nondiff_argnums=(1,))
def gradient_reverse(x, coeff):
    return x  # identity forward: no kernel, zero HBM traffic


def _gr_fwd(x, coeff):
    return x, None


def _gr_bwd(coeff, _, g):
    return (_pallas_scale(g, -float(coeff)),)


gradient_reverse.defvjp(_gr_fwd, _gr_bwd)


class WarmStartGradientReverseLayer:
    """JAX/Pallas port of the PyTorch WarmStartGradientReverseLayer."""

    def __init__(self, alpha, lo=0.0, hi=1.0, max_iters=1000, auto_step=False):
        self.alpha = float(alpha)
        self.lo = float(lo)
        self.hi = float(hi)
        self.iter_num = 0
        self.max_iters = int(max_iters)
        self.auto_step = auto_step

    def coeff(self):
        return (
            2.0 * (self.hi - self.lo)
            / (1.0 + math.exp(-self.alpha * self.iter_num / self.max_iters))
            - (self.hi - self.lo)
            + self.lo
        )

    def __call__(self, x):
        c = self.coeff()
        if self.auto_step:
            self.step()
        return gradient_reverse(x, c)

    def step(self):
        self.iter_num += 1


# ---- DomainAdversarialLoss (plain JAX around the Pallas-backed GRL) --------
# TODO(synk): domain_discriminator is an external user nn.Module and the BCE /
# accuracy act on tiny (B,1) tensors, so they stay in plain JAX.

def binary_accuracy(output, target):
    batch = target.shape[0]
    pred = (output >= 0.5).astype(target.dtype)
    correct = jnp.sum((pred == target).astype(jnp.float32))
    return correct * (100.0 / batch)


def _weighted_bce_mean(p, t, w):
    log_p = jnp.maximum(jnp.log(p), -100.0)       # PyTorch clamps log at -100
    log_1p = jnp.maximum(jnp.log(1.0 - p), -100.0)
    loss = -(t * log_p + (1.0 - t) * log_1p)
    return jnp.mean(w * loss)


class LinearDomainDiscriminator:
    """Tiny linear + sigmoid discriminator standing in for the user module."""

    def __init__(self, key, in_features, dtype=jnp.float32):
        k1, k2 = jax.random.split(key)
        s = 1.0 / math.sqrt(in_features)
        self.w = jax.random.uniform(k1, (in_features, 1), dtype, -s, s)
        self.b = jax.random.uniform(k2, (1,), dtype, -s, s)

    def __call__(self, f):
        return jax.nn.sigmoid(f @ self.w + self.b)


class DomainAdversarialLoss:
    def __init__(self, domain_discriminator, grl=None):
        self.grl = (WarmStartGradientReverseLayer(alpha=1.0, lo=0.0, hi=1.0,
                                                  max_iters=1000, auto_step=True)
                    if grl is None else grl)
        self.domain_discriminator = domain_discriminator
        self.domain_discriminator_accuracy = None

    def __call__(self, f_s, f_t, w_s=None, w_t=None):
        f = self.grl(jnp.concatenate((f_s, f_t), axis=0))
        d = self.domain_discriminator(f)
        half = f_s.shape[0]
        d_s, d_t = d[:half], d[half:]
        d_label_s = jnp.ones((f_s.shape[0], 1), dtype=d.dtype)
        d_label_t = jnp.zeros((f_t.shape[0], 1), dtype=d.dtype)
        self.domain_discriminator_accuracy = 0.5 * (
            binary_accuracy(d_s, d_label_s) + binary_accuracy(d_t, d_label_t))
        if w_s is None:
            w_s = jnp.ones_like(d_label_s)
        if w_t is None:
            w_t = jnp.ones_like(d_label_t)
        return 0.5 * (_weighted_bce_mean(d_s, d_label_s, w_s.reshape(d_s.shape))
                      + _weighted_bce_mean(d_t, d_label_t, w_t.reshape(d_t.shape)))


if __name__ == "__main__":
    key = jax.random.PRNGKey(0)
    k_x, k_s, k_t, k_d = jax.random.split(key, 4)

    # --- 1) GRL on an NCHW-style activation: forward identity, reversed grad.
    x = jax.random.normal(k_x, (2, 4, 16, 16), dtype=jnp.float32)
    grl = WarmStartGradientReverseLayer(alpha=1.0, lo=0.0, hi=1.0,
                                        max_iters=1000, auto_step=True)
    for _ in range(10):
        grl.step()
    coeff = grl.coeff()

    y = jax.block_until_ready(grl(x))
    assert y.shape == x.shape and y.dtype == x.dtype
    assert bool(jnp.allclose(y, x))

    gx = jax.block_until_ready(
        jax.grad(lambda v: jnp.sum(gradient_reverse(v, coeff)))(x))
    assert bool(jnp.allclose(gx, -coeff * jnp.ones_like(x), atol=1e-5, rtol=1e-5))

    # bf16 path exercises the dtype-aware (16, 128) sublane packing.
    xb = x.astype(jnp.bfloat16)
    gxb = jax.block_until_ready(
        jax.grad(lambda v: jnp.sum(gradient_reverse(v, coeff).astype(jnp.float32)))(xb))
    assert gxb.dtype == jnp.bfloat16
    assert bool(jnp.allclose(gxb.astype(jnp.float32),
                             jnp.full(x.shape, -coeff, jnp.float32),
                             atol=1e-2, rtol=1e-2))

    # --- 2) full DomainAdversarialLoss with a small linear discriminator.
    B, H = 2, 32
    f_s = jax.random.normal(k_s, (B, H), dtype=jnp.float32)
    f_t = jax.random.normal(k_t, (B, H), dtype=jnp.float32)
    disc = LinearDomainDiscriminator(k_d, H)
    dal = DomainAdversarialLoss(disc)
    for _ in range(100):
        dal.grl.step()
    c = dal.grl.coeff()

    loss_val, (g_s, g_t) = jax.value_and_grad(
        lambda a, b: dal(a, b), argnums=(0, 1))(f_s, f_t)
    loss_val, g_s, g_t = jax.block_until_ready((loss_val, g_s, g_t))

    # Reference: identical loss without the reversal -> grads must be -c * ref.
    def ref_loss(a, b):
        f = jnp.concatenate((a, b), axis=0)
        d = disc(f)
        d_s, d_t = d[:B], d[B:]
        ls = _weighted_bce_mean(d_s, jnp.ones((B, 1), d.dtype), jnp.ones((B, 1), d.dtype))
        lt = _weighted_bce_mean(d_t, jnp.zeros((B, 1), d.dtype), jnp.ones((B, 1), d.dtype))
        return 0.5 * (ls + lt)

    ref_val, (r_s, r_t) = jax.value_and_grad(ref_loss, argnums=(0, 1))(f_s, f_t)
    assert bool(jnp.allclose(loss_val, ref_val, atol=1e-6, rtol=1e-6))
    assert bool(jnp.allclose(g_s, -c * r_s, atol=1e-5, rtol=1e-5))
    assert bool(jnp.allclose(g_t, -c * r_t, atol=1e-5, rtol=1e-5))

    print("KERNEL_OK")
</pallas_src>

<mosaic_0001>
module attributes {stable_mosaic.version = 11 : i64} {
  func.func @_scale_kernel(%arg0: i32, %arg1: memref<1xf32, #tpu.memory_space<smem>>, %arg2: memref<8x128xf32, #tpu.memory_space<vmem>>, %arg3: memref<8x128xf32, #tpu.memory_space<vmem>>) attributes {dimension_semantics = [#tpu.dimension_semantics<parallel>], iteration_bounds = array<i64: 2>, scalar_prefetch = 0 : i64, scratch_operands = 0 : i64, tpu.core_type = #tpu.core_type<tc>, window_params = [{transform_indices = @transform_0, window_bounds = array<i64: 1>}, {transform_indices = @transform_1, window_bounds = array<i64: 8, 128>}, {transform_indices = @transform_2, window_bounds = array<i64: 8, 128>}]} {
    %c0 = arith.constant 0 : index
    %c0_0 = arith.constant 0 : index
    %0 = vector.load %arg2[%c0, %c0_0] : memref<8x128xf32, #tpu.memory_space<vmem>>, vector<8x128xf32>
    %c0_1 = arith.constant 0 : index
    %1 = memref.load %arg1[%c0_1] : memref<1xf32, #tpu.memory_space<smem>>
    %2 = vector.broadcast %1 : f32 to vector<8x128xf32>
    %3 = arith.mulf %0, %2 : vector<8x128xf32>
    %c0_2 = arith.constant 0 : index
    %c0_3 = arith.constant 0 : index
    %4 = vector.load %arg3[%c0_2, %c0_3] : memref<8x128xf32, #tpu.memory_space<vmem>>, vector<8x128xf32>
    tpu.vector_store %arg3[%c0_2, %c0_3], %3 {strides = array<i32>} : memref<8x128xf32, #tpu.memory_space<vmem>>, vector<8x128xf32>,
    return
  }
  func.func @transform_0(%arg0: i32) -> i32 {
    %c0_i32 = arith.constant 0 : i32
    %c0_i32_0 = arith.constant 0 : i32
    return %c0_i32 : i32
  }
  func.func @transform_1(%arg0: i32) -> (i32, i32) {
    %c0_i32 = arith.constant 0 : i32
    %c0_i32_0 = arith.constant 0 : i32
    return %arg0, %c0_i32 : i32, i32
  }
  func.func @transform_2(%arg0: i32) -> (i32, i32) {
    %c0_i32 = arith.constant 0 : i32
    %c0_i32_0 = arith.constant 0 : i32
    return %arg0, %c0_i32 : i32, i32
  }
}

</mosaic_0001>

<llo_original>
// kernel: tpu_custom_call.1
$region0: #{tpu_custom_call.1}
  #allocation0 [shape = 'u32[]', space=smem, size = 0x4, offset = 0x4, fixed_abs, tag = 'smem constant byte address 0x4 - core index']
  #allocation1 [shape = 'u32[144,128]{1,0:T(1,128)}', space=vmem, size = 0x12000, scoped, tag = 'internal scratch']
  #allocation2 [shape = 'f32[1]{0:T(128)S(6)}', space=smem, size = 0x200, scoped, tag = 'scoped memory for tpu_custom_call.1']
  %s0 = inlined_call_operand.<no memory space> [shape: f32[1], index: 0, kind: input, shape index: {}]
  %s1 = inlined_call_operand.hbm [shape: f32[16,128], index: 1, kind: input, shape index: {}, may-alias: {1,2}]
  %s2 = inlined_call_operand.hbm [shape: f32[16,128], index: 2, kind: output, shape index: {}, may-alias: {1,2}]
  %s3 = sld [smem:[#allocation0]]
  $region45: #{tpu_custom_call.1} parent=0
    _
  %s5 = ssub.s32 1, %s3
  %s6 = scalar_select 0, %s5, %s3
  %7 = sst [smem:[#allocation2]] %s0
  $region1: #{tpu_custom_call.1} parent=0
    #allocation3 [shape = 'u8[8192]{0}', space=vmem, size = 0x2000, scoped, tag = 'input window, operand 1']
    #allocation4 [shape = 's32[2]{0}', space=sflag, size = 0x8, scoped, tag = 'scoped memory for tpu_custom_call.1']
    #allocation5 [shape = 's32[2]{0}', space=sflag, size = 0x8, scoped, tag = 'scoped memory for tpu_custom_call.1']
    #allocation6 [shape = 'u8[8192]{0}', space=vmem, size = 0x2000, scoped, tag = 'output window, operand 0']
    %8 = vsyncpa [#allocation4], 0
    %s9 = scalar_lea.sflag [#allocation4], 1
    %10 = vsyncpa %s9, 0
    %11 = vsyncpa [#allocation5], 0
    %s12 = scalar_lea.sflag [#allocation5], 1
    %13 = vsyncpa %s12, 0
    loop: start=0, step=1, limit=4
    $region2: #{tpu_custom_call.1} parent=1 // loop_pre_header
      _
    $region3: #{tpu_custom_call.1} parent=1 // loop_header
      %s15 = sphi 0, %s19
      %p16 = scmp.ge.s32.totalorder %s15, 4
      %s23 = sphi 0, %s23
      %s25 = sphi 0, %s23
      %s26 = sphi 0, %s25
      %s40 = sphi 0, %s26
      %s46 = sphi 0, %s48
      %s49 = sphi 0, %s46
      %s50 = sphi 0, %s49
      %s66 = sphi 0, %s50
      %s72 = sphi 0, %s74
      %s75 = sphi 0, %s72
      %s76 = sphi 0, %s75
      %s92 = sphi 0, %s76
    $region4: #{tpu_custom_call.1} parent=1 // loop_header_branch
      %18 = sbr.rel (%p16) target = $region8
    $region5: #{tpu_custom_call.1} parent=1 // loop_body
      %s20 = ssub.s32 %s15, 1
      %s21 = ssub.s32 %s15, 2
      %s22 = sadd.s32 %s15, 1
      %s24 = sadd.s32 %s23, 1
      %p27 = scmp.eq.s32.totalorder %s15, 1
      %p28 = scmp.ne.s32.totalorder %s23, %s25
      %p29 = scmp.eq.s32.totalorder %s15, 0
      %p30 = por %p28, %p29
      %p31 = scmp.ne.s32.totalorder %s23, %s25
      %p32 = scmp.eq.s32.totalorder %s20, 1
      %p33 = por %p31, %p32
      %p34 = scmp.ne.s32.totalorder %s25, %s26
      %p35 = scmp.eq.s32.totalorder %s20, 0
      %p36 = por %p34, %p35
      %p37 = scmp.ne.s32.totalorder %s25, %s26
      %p38 = scmp.eq.s32.totalorder %s21, 1
      %p39 = por %p37, %p38
      %p41 = scmp.ne.s32.totalorder %s26, %s40
      %p42 = scmp.eq.s32.totalorder %s21, 0
      %p43 = por %p41, %p42
      %s44 = ssub.s32 %s15, %s22
      %p45 = scmp.eq.s32.totalorder %s44, 0
      %s47 = sadd.s32 %s46, 1
      %s48 = scalar_select %p45, %s46, %s47
      %p51 = pneg %p45
      %p52 = scmp.eq.s32.totalorder %s15, 1
      %p53 = por %p51, %p52
      %p54 = scmp.ne.s32.totalorder %s46, %s49
      %p55 = scmp.eq.s32.totalorder %s15, 0
      %p56 = por %p54, %p55
      %p57 = scmp.ne.s32.totalorder %s46, %s49
      %p58 = scmp.eq.s32.totalorder %s20, 1
      %p59 = por %p57, %p58
      %p60 = scmp.ne.s32.totalorder %s49, %s50
      %p61 = scmp.eq.s32.totalorder %s20, 0
      %p62 = por %p60, %p61
      %p63 = scmp.ne.s32.totalorder %s49, %s50
      %p64 = scmp.eq.s32.totalorder %s21, 1
      %p65 = por %p63, %p64
      %p67 = scmp.ne.s32.totalorder %s50, %s66
      %p68 = scmp.eq.s32.totalorder %s21, 0
      %p69 = por %p67, %p68
      %s70 = ssub.s32 %s15, %s22
      %p71 = scmp.eq.s32.totalorder %s70, 0
      %s73 = sadd.s32 %s72, 1
      %s74 = scalar_select %p71, %s72, %s73
      %p77 = pneg %p71
      %p78 = scmp.eq.s32.totalorder %s15, 1
      %p79 = por %p77, %p78
      %p80 = scmp.ne.s32.totalorder %s72, %s75
      %p81 = scmp.eq.s32.totalorder %s15, 0
      %p82 = por %p80, %p81
      %p83 = scmp.ne.s32.totalorder %s72, %s75
      %p84 = scmp.eq.s32.totalorder %s20, 1
      %p85 = por %p83, %p84
      %p86 = scmp.ne.s32.totalorder %s75, %s76
      %p87 = scmp.eq.s32.totalorder %s20, 0
      %p88 = por %p86, %p87
      %p89 = scmp.ne.s32.totalorder %s75, %s76
      %p90 = scmp.eq.s32.totalorder %s21, 1
      %p91 = por %p89, %p90
      %p93 = scmp.ne.s32.totalorder %s76, %s92
      %p94 = scmp.eq.s32.totalorder %s21, 0
      %p95 = por %p93, %p94
      %p96 = scmp.le.s32.totalorder 1, %s15
      %p97 = scmp.lt.s32.totalorder %s15, 3
      %p98 = pnand %p96, %p97
      %p99 = pneg %p98
      // Predicated region
      $region9: #{tpu_custom_call.1} parent=5 // pred_check
        _
      $region10: #{tpu_custom_call.1} parent=5 // pred_check_branch
        %101 = sbr.rel (%p98) target = $region12
      $region11: #{tpu_custom_call.1} parent=5 // pred_region
        %s102 = ssub.s32 %s15, 1
        // Predicated region
        $region13: #{tpu_custom_call.1} parent=11 // pred_check
          %p103 = pneg %p36
        $region14: #{tpu_custom_call.1} parent=11 // pred_check_branch
          %105 = sbr.rel (%p103) target = $region16
        $region15: #{tpu_custom_call.1} parent=11 // pred_region
          _
        $region16: #{tpu_custom_call.1} parent=11 // pred_fallthru
          _
      $region12: #{tpu_custom_call.1} parent=5 // pred_fallthru
        _
      %p106 = scmp.lt.s32.totalorder %s15, 2
      // Predicated region
      $region17: #{tpu_custom_call.1} parent=5 // pred_check
        %p107 = pneg %p106
      $region18: #{tpu_custom_call.1} parent=5 // pred_check_branch
        %109 = sbr.rel (%p107) target = $region20
      $region19: #{tpu_custom_call.1} parent=5 // pred_region
        // Predicated region
        $region21: #{tpu_custom_call.1} parent=19 // pred_check
          %p110 = pneg %p56
        $region22: #{tpu_custom_call.1} parent=19 // pred_check_branch
          %112 = sbr.rel (%p110) target = $region24
        $region23: #{tpu_custom_call.1} parent=19 // pred_region
          %s113 = sand.u32 %s46, 1
          %s114 = scalar_lea.sflag [#allocation4], %s113
          %s115 = sand.u32 %s46, 1
          %s116 = smul.addr %s115, 8
          %s117 = scalar_lea.vmem [#allocation3], %s116
          %s119 = ssub.s32 128, 128
          %120 = vsyncadd %s114, %s119
          %s121 = smul.addr %s15, 128
          %s122 = scalar_lea.hbm %s1, %s121
          %s124 = sshll.u32 %s117, 4
          %s125 = int_to_ptr.vmem [resolvable:$true] %s124
          %127 = dma.hbm_to_vmem [thread:$0]  %s122, 128, %s125, %s114
        $region24: #{tpu_custom_call.1} parent=19 // pred_fallthru
          _
      $region20: #{tpu_custom_call.1} parent=5 // pred_fallthru
        _
      %p128 = scmp.le.s32.totalorder 1, %s15
      %p129 = scmp.lt.s32.totalorder %s15, 3
      %p130 = pnand %p128, %p129
      %p131 = pneg %p130
      // Predicated region
      $region25: #{tpu_custom_call.1} parent=5 // pred_check
        _
      $region26: #{tpu_custom_call.1} parent=5 // pred_check_branch
        %133 = sbr.rel (%p130) target = $region28
      $region27: #{tpu_custom_call.1} parent=5 // pred_region
        %s134 = ssub.s32 %s15, 1
        %s135 = sand.u32 %s49, 1
        %s136 = scalar_lea.sflag [#allocation4], %s135
        %s137 = sand.u32 %s49, 1
        %s138 = smul.addr %s137, 8
        %s139 = scalar_lea.vmem [#allocation3], %s138
        // Predicated region
        $region29: #{tpu_custom_call.1} parent=27 // pred_check
          %p140 = pneg %p62
        $region30: #{tpu_custom_call.1} parent=27 // pred_check_branch
          %142 = sbr.rel (%p140) target = $region32
        $region31: #{tpu_custom_call.1} parent=27 // pred_region
          %143 = dma.done %s136, 128
        $region32: #{tpu_custom_call.1} parent=27 // pred_fallthru
          _
        %p144 = pneg %p36
        %p145 = pneg %p33
        %s146 = sand.u32 %s49, 1
        %s147 = scalar_lea.sflag [#allocation4], %s146
        %s148 = sand.u32 %s49, 1
        %s149 = smul.addr %s148, 8
        %s150 = scalar_lea.vmem [#allocation3], %s149
        %p151 = pneg %p62
        %p152 = pneg %p59
        %p153 = pneg %p88
        %p154 = pneg %p85
        %s155 = sand.u32 %s75, 1
        %s156 = scalar_lea.sflag [#allocation5], %s155
        %s157 = sand.u32 %s75, 1
        %s158 = smul.addr %s157, 8
        %s159 = scalar_lea.vmem [#allocation6], %s158
        %v160 = vld [vmem:[%s139] sm:$0xff]
        %s161 = sld [smem:[#allocation2]]
        %v162 = vstv %s161
        %v163 = vmul.f32 %v160, %v162
        %164 = vst [vmem:[%s159] sm:$0xff] %v163
        %s165 = sand.u32 %s75, 1
        %s166 = scalar_lea.sflag [#allocation5], %s165
        %s167 = sand.u32 %s75, 1
        %s168 = smul.addr %s167, 8
        %s169 = scalar_lea.vmem [#allocation6], %s168
        // Predicated region
        $region33: #{tpu_custom_call.1} parent=27 // pred_check
          %p170 = pneg %p85
        $region34: #{tpu_custom_call.1} parent=27 // pred_check_branch
          %172 = sbr.rel (%p170) target = $region36
        $region35: #{tpu_custom_call.1} parent=27 // pred_region
          %s174 = ssub.s32 128, 128
          %175 = vsyncadd %s166, %s174
          %s176 = smul.addr %s20, 128
          %s177 = scalar_lea.hbm %s2, %s176
          %s179 = sshll.u32 %s169, 4
          %s180 = int_to_ptr.vmem [resolvable:$true] %s179
          %182 = dma.vmem_to_hbm [thread:$0]  %s180, 128, %s177, %s166
        $region36: #{tpu_custom_call.1} parent=27 // pred_fallthru
          _
      $region28: #{tpu_custom_call.1} parent=5 // pred_fallthru
        _
      %p183 = scmp.le.s32.totalorder 2, %s15
      // Predicated region
      $region37: #{tpu_custom_call.1} parent=5 // pred_check
        %p184 = pneg %p183
      $region38: #{tpu_custom_call.1} parent=5 // pred_check_branch
        %186 = sbr.rel (%p184) target = $region40
      $region39: #{tpu_custom_call.1} parent=5 // pred_region
        %s187 = ssub.s32 %s15, 2
        // Predicated region
        $region41: #{tpu_custom_call.1} parent=39 // pred_check
          %p188 = pneg %p91
        $region42: #{tpu_custom_call.1} parent=39 // pred_check_branch
          %190 = sbr.rel (%p188) target = $region44
        $region43: #{tpu_custom_call.1} parent=39 // pred_region
          %s191 = sand.u32 %s76, 1
          %s192 = scalar_lea.sflag [#allocation5], %s191
          %s193 = sand.u32 %s76, 1
          %s194 = smul.addr %s193, 8
          %s195 = scalar_lea.vmem [#allocation6], %s194
          %196 = dma.done %s192, 128
        $region44: #{tpu_custom_call.1} parent=39 // pred_fallthru
          _
      $region40: #{tpu_custom_call.1} parent=5 // pred_fallthru
        _
    $region6: #{tpu_custom_call.1} parent=1 // loop_footer
      %s19 = sadd.s32 1, %s15
    $region7: #{tpu_custom_call.1} parent=1 // loop_footer_branch
      %14 = sbr.rel target = $region3
    $region8: #{tpu_custom_call.1} parent=1 // loop_exit
      _
    %197 = vsyncpa [#allocation4], 1
    %s198 = scalar_lea.sflag [#allocation4], 1
    %199 = vsyncpa %s198, 1
    %200 = vsyncpa [#allocation5], 1
    %s201 = scalar_lea.sflag [#allocation5], 1
    %202 = vsyncpa %s201, 1

</llo_original>
